<compile_context>
chip_gen: v5e
topology: v5e:2x2
jax: 0.10.0
libtpu: 0.0.40
codegen_flags: <defaults>
</compile_context>

<pallas_src>
import functools

import jax
import jax.numpy as jnp
from jax.experimental import pallas as pl
from jax.experimental.pallas import tpu as pltpu


_LANE = 128                       # lane width of a vreg
_TARGET_OUT_BYTES = 4 << 20       # ~4 MiB output blocks: ~85%+ of HBM roofline
_UNALIGNED_OUT_BYTES = 512 << 10  # cap in-register tile when c1 is unaligned


def _cdiv(a: int, b: int) -> int:
    return -(-a // b)


def _round_up(x: int, m: int) -> int:
    return ((x + m - 1) // m) * m


def _sublane_pack(dtype) -> int:
    # 8 rows/vreg for 4-byte dtypes, 16 for 2-byte, 32 for 1-byte.
    return 32 // jnp.dtype(dtype).itemsize


def _vmem_budget_bytes() -> int:
    # Generation-aware cap on the double-buffered block footprint:
    # ~32 MiB on v5e/v6e (128 MiB VMEM), ~16 MiB on v7x (64 MiB VMEM).
    try:
        cap = pltpu.get_tpu_info().vmem_capacity_bytes
    except Exception:
        cap = 128 << 20
    return max(8 << 20, cap // 4)


# --------------------- primary path: pure HBM->HBM DMA ---------------------


def _concat_dma_kernel(n, c1, c2, x1_ref, x2_ref, o_ref, sems):
    # Pure data movement: two contiguous HBM->HBM copies per batch element.
    # n is a small static Python int (batch size), so this unrolls at trace
    # time into 2*n DMA descriptors; start them all, then wait.
    copies = []
    for b in range(n):
        copies.append(pltpu.make_async_copy(
            x1_ref.at[b], o_ref.at[b, pl.ds(0, c1), :], sems.at[b, 0]))
        copies.append(pltpu.make_async_copy(
            x2_ref.at[b], o_ref.at[b, pl.ds(c1, c2), :], sems.at[b, 1]))
    for cp in copies:           # issue everything first -> DMAs overlap
        cp.start()
    for cp in copies:
        cp.wait()


def _concat_channels_dma(x1f, x2f):
    n, c1, hw = x1f.shape
    _, c2, _ = x2f.shape
    co = c1 + c2
    kernel = functools.partial(_concat_dma_kernel, n, c1, c2)
    return pl.pallas_call(
        kernel,
        out_shape=jax.ShapeDtypeStruct((n, co, hw), x1f.dtype),
        in_specs=[pl.BlockSpec(memory_space=pl.ANY),
                  pl.BlockSpec(memory_space=pl.ANY)],
        out_specs=pl.BlockSpec(memory_space=pl.ANY),
        scratch_shapes=[pltpu.SemaphoreType.DMA((n, 2))],
    )(x1f, x2f)


# --------------------- fallback path: VMEM pipelined ------------------------


def _concat_kernel_aligned(c1, x1_ref, x2_ref, o_ref):
    # c1 is a multiple of the sublane pack -> both stores are unmasked,
    # sublane-aligned block writes.
    o_ref[0, 0:c1, :] = x1_ref[0, :, :]
    o_ref[0, c1:, :] = x2_ref[0, :, :]


def _concat_kernel_fused(x1_ref, x2_ref, o_ref):
    # c1 not sublane-aligned: assemble the output tile in-registers so the
    # HBM-facing store stays a single full-block unmasked stream.  Tile size
    # for this path is capped (see _UNALIGNED_OUT_BYTES) to limit vreg
    # pressure from the cross-sublane relayout.
    o_ref[...] = jnp.concatenate([x1_ref[...], x2_ref[...]], axis=1)


def _choose_hw_tile(hw, co, itemsize, vmem_budget, target_out_bytes):
    # Lanes allowed by the target output-block byte size (co * thw * itemsize)
    lanes_by_target = (target_out_bytes // (co * itemsize)) // _LANE * _LANE
    # Lanes allowed by the double-buffered in+out footprint (~4*co*thw*bytes)
    lanes_by_vmem = (vmem_budget // (4 * co * itemsize)) // _LANE * _LANE
    max_tile = max(_LANE, min(lanes_by_target, lanes_by_vmem))
    if hw <= max_tile:
        return hw                       # full-dim block: always legal
    # Balanced 128-aligned tiles: no tiny masked remainder, even grid work.
    n_tiles = _cdiv(hw, max_tile)
    return _round_up(_cdiv(hw, n_tiles), _LANE)


def _concat_channels_pipelined(x1f, x2f):
    n, c1, hw = x1f.shape
    _, c2, _ = x2f.shape
    co = c1 + c2
    itemsize = jnp.dtype(x1f.dtype).itemsize
    aligned = (c1 % _sublane_pack(x1f.dtype) == 0)

    budget = _vmem_budget_bytes()
    target = _TARGET_OUT_BYTES if aligned else _UNALIGNED_OUT_BYTES
    thw = _choose_hw_tile(hw, co, itemsize, budget, target)
    grid = (n, _cdiv(hw, thw))

    if aligned:
        kernel = functools.partial(_concat_kernel_aligned, c1)
    else:
        kernel = _concat_kernel_fused

    # Exact scoped-VMEM limit: ~2.2x the double-buffered block footprint plus
    # margin (never below the footprint), floored at a safe 8 MiB.
    block_bytes = 4 * co * thw * itemsize
    vmem_limit = max(int(2.2 * block_bytes) + (1 << 20), 8 << 20)

    return pl.pallas_call(
        kernel,
        out_shape=jax.ShapeDtypeStruct((n, co, hw), x1f.dtype),
        grid=grid,
        in_specs=[
            pl.BlockSpec((1, c1, thw), lambda i, j: (i, 0, j)),
            pl.BlockSpec((1, c2, thw), lambda i, j: (i, 0, j)),
        ],
        out_specs=pl.BlockSpec((1, co, thw), lambda i, j: (i, 0, j)),
        compiler_params=pltpu.CompilerParams(
            dimension_semantics=("parallel", "parallel"),
            vmem_limit_bytes=vmem_limit,
        ),
    )(x1f, x2f)


# ----------------------------- wrapper --------------------------------------


def _concat_channels(x1, x2, *, use_dma=True):
    n, c1, h, w = x1.shape
    n2, c2, h2, w2 = x2.shape
    assert (n, h, w) == (n2, h2, w2), "route maps must match in N, H, W"
    assert x1.dtype == x2.dtype, "mixed-dtype routes not supported"
    hw = h * w
    co = c1 + c2

    # Metadata-only reshape to a lane-dense (N, C, H*W) layout.
    x1f = x1.reshape(n, c1, hw)
    x2f = x2.reshape(n, c2, hw)

    out = None
    if use_dma:
        try:
            out = _concat_channels_dma(x1f, x2f)
        except Exception:
            out = None  # lowering corner case -> VMEM-pipelined fallback
    if out is None:
        out = _concat_channels_pipelined(x1f, x2f)
    return out.reshape(n, co, h, w)


class RouteLayer:
    """JAX/Pallas equivalent of the PyTorch RouteLayer."""

    def __init__(self, index, route_layer_indexs):
        self.index = index
        self.route_layer_indexs = route_layer_indexs

    def __call__(self, output_cache):
        assert isinstance(output_cache, dict)
        assert 1 <= len(self.route_layer_indexs) <= 2, (
            "RouteLayer supports 1 or 2 route indexes")
        if len(self.route_layer_indexs) == 1:
            # Pure pass-through: return the cached array directly. No kernel,
            # no HBM round trip (matches `out = output_cache[idx]` in torch).
            return output_cache[self.route_layer_indexs[0]]
        map_1 = output_cache[self.route_layer_indexs[0]]
        map_2 = output_cache[self.route_layer_indexs[1]]
        return _concat_channels(map_1, map_2)

    def __repr__(self):
        return f"route {self.route_layer_indexs}"


# ----------------------------- main ------------------------------------------

if __name__ == "__main__":
    key = jax.random.PRNGKey(0)
    k1, k2, k3, k4, k5, k6 = jax.random.split(key, 6)

    # Case 1: spec shapes -> primary HBM->HBM DMA concat path.
    N, C1, C2, H, W = 2, 4, 4, 16, 16
    x1 = jax.random.normal(k1, (N, C1, H, W), dtype=jnp.float32)
    x2 = jax.random.normal(k2, (N, C2, H, W), dtype=jnp.float32)
    output_cache = {3: x1, 7: x2}
    route_cat = RouteLayer(index=10, route_layer_indexs=[3, 7])
    out_cat = route_cat(output_cache)
    jax.block_until_ready(out_cat)
    ref_cat = jnp.concatenate([x1, x2], axis=1)
    assert out_cat.shape == (N, C1 + C2, H, W)
    assert jnp.array_equal(out_cat, ref_cat)

    # Case 2: VMEM-pipelined path, sublane-aligned channels (aligned kernel).
    N2, C1b, C2b, Hb, Wb = 1, 8, 16, 48, 48
    y1 = jax.random.normal(k3, (N2, C1b, Hb, Wb), dtype=jnp.float32)
    y2 = jax.random.normal(k4, (N2, C2b, Hb, Wb), dtype=jnp.float32)
    out2 = _concat_channels(y1, y2, use_dma=False)
    jax.block_until_ready(out2)
    assert jnp.array_equal(out2, jnp.concatenate([y1, y2], axis=1))

    # Case 3: VMEM-pipelined path, unaligned c1 (fused-store kernel).
    z1 = jax.random.normal(k5, (2, 4, 16, 16), dtype=jnp.float32)
    z2 = jax.random.normal(k6, (2, 12, 16, 16), dtype=jnp.float32)
    out3 = _concat_channels(z1, z2, use_dma=False)
    jax.block_until_ready(out3)
    assert jnp.array_equal(out3, jnp.concatenate([z1, z2], axis=1))

    # Case 4: single route -> direct pass-through (no kernel launch).
    route_one = RouteLayer(index=11, route_layer_indexs=[3])
    out_one = route_one(output_cache)
    jax.block_until_ready(out_one)
    assert out_one.shape == (N, C1, H, W)
    assert jnp.array_equal(out_one, x1)

    print("KERNEL_OK")
</pallas_src>

<mosaic_0001>
module attributes {stable_mosaic.version = 11 : i64} {
  func.func @_concat_dma_kernel(%arg0: memref<2x4x256xf32, #tpu.memory_space<any>>, %arg1: memref<2x4x256xf32, #tpu.memory_space<any>>, %arg2: memref<2x8x256xf32, #tpu.memory_space<any>>, %arg3: memref<2x2x!tpu.dma_semaphore, #tpu.memory_space<semaphore_mem>>) attributes {dimension_semantics = [], scalar_prefetch = 0 : i64, scratch_operands = 1 : i64, tpu.core_type = #tpu.core_type<tc>} {
    %c0_i32 = arith.constant 0 : i32
    %c0_i32_0 = arith.constant 0 : i32
    %c0_i32_1 = arith.constant 0 : i32
    %c0_i32_2 = arith.constant 0 : i32
    %c0_i32_3 = arith.constant 0 : i32
    %c0_i32_4 = arith.constant 0 : i32
    %0 = tpu.memref_slice %arg0[%c0_i32, %c0_i32_3, %c0_i32_4] : memref<2x4x256xf32, #tpu.memory_space<any>> -> memref<1x4x256xf32, #tpu.memory_space<any>>
    %1 = tpu.memref_squeeze %0 : memref<1x4x256xf32, #tpu.memory_space<any>> -> memref<4x256xf32, #tpu.memory_space<any>>
    %c0_i32_5 = arith.constant 0 : i32
    %c0_i32_6 = arith.constant 0 : i32
    %2 = tpu.memref_slice %arg2[%c0_i32_0, %c0_i32_5, %c0_i32_6] : memref<2x8x256xf32, #tpu.memory_space<any>> -> memref<1x4x256xf32, #tpu.memory_space<any>>
    %3 = tpu.memref_squeeze %2 : memref<1x4x256xf32, #tpu.memory_space<any>> -> memref<4x256xf32, #tpu.memory_space<any>>
    %4 = tpu.memref_slice %arg3[%c0_i32_1, %c0_i32_2] : memref<2x2x!tpu.dma_semaphore, #tpu.memory_space<semaphore_mem>> -> memref<1x1x!tpu.dma_semaphore, #tpu.memory_space<semaphore_mem>>
    %5 = tpu.memref_squeeze %4 : memref<1x1x!tpu.dma_semaphore, #tpu.memory_space<semaphore_mem>> -> memref<!tpu.dma_semaphore, #tpu.memory_space<semaphore_mem>>
    tpu.enqueue_dma source(%1 : memref<4x256xf32, #tpu.memory_space<any>>) target(%3 : memref<4x256xf32, #tpu.memory_space<any>>) target_semaphore(%5 : memref<!tpu.dma_semaphore, #tpu.memory_space<semaphore_mem>>)
    %c0_i32_7 = arith.constant 0 : i32
    %c0_i32_8 = arith.constant 0 : i32
    %c0_i32_9 = arith.constant 0 : i32
    %c1_i32 = arith.constant 1 : i32
    %c0_i32_10 = arith.constant 0 : i32
    %c0_i32_11 = arith.constant 0 : i32
    %6 = tpu.memref_slice %arg1[%c0_i32_7, %c0_i32_10, %c0_i32_11] : memref<2x4x256xf32, #tpu.memory_space<any>> -> memref<1x4x256xf32, #tpu.memory_space<any>>
    %7 = tpu.memref_squeeze %6 : memref<1x4x256xf32, #tpu.memory_space<any>> -> memref<4x256xf32, #tpu.memory_space<any>>
    %c4_i32 = arith.constant 4 : i32
    %c0_i32_12 = arith.constant 0 : i32
    %8 = tpu.memref_slice %arg2[%c0_i32_8, %c4_i32, %c0_i32_12] : memref<2x8x256xf32, #tpu.memory_space<any>> -> memref<1x4x256xf32, #tpu.memory_space<any>>
    %9 = tpu.memref_squeeze %8 : memref<1x4x256xf32, #tpu.memory_space<any>> -> memref<4x256xf32, #tpu.memory_space<any>>
    %10 = tpu.memref_slice %arg3[%c0_i32_9, %c1_i32] : memref<2x2x!tpu.dma_semaphore, #tpu.memory_space<semaphore_mem>> -> memref<1x1x!tpu.dma_semaphore, #tpu.memory_space<semaphore_mem>>
    %11 = tpu.memref_squeeze %10 : memref<1x1x!tpu.dma_semaphore, #tpu.memory_space<semaphore_mem>> -> memref<!tpu.dma_semaphore, #tpu.memory_space<semaphore_mem>>
    tpu.enqueue_dma source(%7 : memref<4x256xf32, #tpu.memory_space<any>>) target(%9 : memref<4x256xf32, #tpu.memory_space<any>>) target_semaphore(%11 : memref<!tpu.dma_semaphore, #tpu.memory_space<semaphore_mem>>)
    %c1_i32_13 = arith.constant 1 : i32
    %c1_i32_14 = arith.constant 1 : i32
    %c1_i32_15 = arith.constant 1 : i32
    %c0_i32_16 = arith.constant 0 : i32
    %c0_i32_17 = arith.constant 0 : i32
    %c0_i32_18 = arith.constant 0 : i32
    %12 = tpu.memref_slice %arg0[%c1_i32_13, %c0_i32_17, %c0_i32_18] : memref<2x4x256xf32, #tpu.memory_space<any>> -> memref<1x4x256xf32, #tpu.memory_space<any>>
    %13 = tpu.memref_squeeze %12 : memref<1x4x256xf32, #tpu.memory_space<any>> -> memref<4x256xf32, #tpu.memory_space<any>>
    %c0_i32_19 = arith.constant 0 : i32
    %c0_i32_20 = arith.constant 0 : i32
    %14 = tpu.memref_slice %arg2[%c1_i32_14, %c0_i32_19, %c0_i32_20] : memref<2x8x256xf32, #tpu.memory_space<any>> -> memref<1x4x256xf32, #tpu.memory_space<any>>
    %15 = tpu.memref_squeeze %14 : memref<1x4x256xf32, #tpu.memory_space<any>> -> memref<4x256xf32, #tpu.memory_space<any>>
    %16 = tpu.memref_slice %arg3[%c1_i32_15, %c0_i32_16] : memref<2x2x!tpu.dma_semaphore, #tpu.memory_space<semaphore_mem>> -> memref<1x1x!tpu.dma_semaphore, #tpu.memory_space<semaphore_mem>>
    %17 = tpu.memref_squeeze %16 : memref<1x1x!tpu.dma_semaphore, #tpu.memory_space<semaphore_mem>> -> memref<!tpu.dma_semaphore, #tpu.memory_space<semaphore_mem>>
    tpu.enqueue_dma source(%13 : memref<4x256xf32, #tpu.memory_space<any>>) target(%15 : memref<4x256xf32, #tpu.memory_space<any>>) target_semaphore(%17 : memref<!tpu.dma_semaphore, #tpu.memory_space<semaphore_mem>>)
    %c1_i32_21 = arith.constant 1 : i32
    %c1_i32_22 = arith.constant 1 : i32
    %c1_i32_23 = arith.constant 1 : i32
    %c1_i32_24 = arith.constant 1 : i32
    %c0_i32_25 = arith.constant 0 : i32
    %c0_i32_26 = arith.constant 0 : i32
    %18 = tpu.memref_slice %arg1[%c1_i32_21, %c0_i32_25, %c0_i32_26] : memref<2x4x256xf32, #tpu.memory_space<any>> -> memref<1x4x256xf32, #tpu.memory_space<any>>
    %19 = tpu.memref_squeeze %18 : memref<1x4x256xf32, #tpu.memory_space<any>> -> memref<4x256xf32, #tpu.memory_space<any>>
    %c4_i32_27 = arith.constant 4 : i32
    %c0_i32_28 = arith.constant 0 : i32
    %20 = tpu.memref_slice %arg2[%c1_i32_22, %c4_i32_27, %c0_i32_28] : memref<2x8x256xf32, #tpu.memory_space<any>> -> memref<1x4x256xf32, #tpu.memory_space<any>>
    %21 = tpu.memref_squeeze %20 : memref<1x4x256xf32, #tpu.memory_space<any>> -> memref<4x256xf32, #tpu.memory_space<any>>
    %22 = tpu.memref_slice %arg3[%c1_i32_23, %c1_i32_24] : memref<2x2x!tpu.dma_semaphore, #tpu.memory_space<semaphore_mem>> -> memref<1x1x!tpu.dma_semaphore, #tpu.memory_space<semaphore_mem>>
    %23 = tpu.memref_squeeze %22 : memref<1x1x!tpu.dma_semaphore, #tpu.memory_space<semaphore_mem>> -> memref<!tpu.dma_semaphore, #tpu.memory_space<semaphore_mem>>
    tpu.enqueue_dma source(%19 : memref<4x256xf32, #tpu.memory_space<any>>) target(%21 : memref<4x256xf32, #tpu.memory_space<any>>) target_semaphore(%23 : memref<!tpu.dma_semaphore, #tpu.memory_space<semaphore_mem>>)
    %c0_i32_29 = arith.constant 0 : i32
    %c0_i32_30 = arith.constant 0 : i32
    %c0_i32_31 = arith.constant 0 : i32
    %c0_i32_32 = arith.constant 0 : i32
    %c0_i32_33 = arith.constant 0 : i32
    %c0_i32_34 = arith.constant 0 : i32
    %24 = tpu.memref_slice %arg0[%c0_i32_29, %c0_i32_33, %c0_i32_34] : memref<2x4x256xf32, #tpu.memory_space<any>> -> memref<1x4x256xf32, #tpu.memory_space<any>>
    %25 = tpu.memref_squeeze %24 : memref<1x4x256xf32, #tpu.memory_space<any>> -> memref<4x256xf32, #tpu.memory_space<any>>
    %c0_i32_35 = arith.constant 0 : i32
    %c0_i32_36 = arith.constant 0 : i32
    %26 = tpu.memref_slice %arg2[%c0_i32_30, %c0_i32_35, %c0_i32_36] : memref<2x8x256xf32, #tpu.memory_space<any>> -> memref<1x4x256xf32, #tpu.memory_space<any>>
    %27 = tpu.memref_squeeze %26 : memref<1x4x256xf32, #tpu.memory_space<any>> -> memref<4x256xf32, #tpu.memory_space<any>>
    %28 = tpu.memref_slice %arg3[%c0_i32_31, %c0_i32_32] : memref<2x2x!tpu.dma_semaphore, #tpu.memory_space<semaphore_mem>> -> memref<1x1x!tpu.dma_semaphore, #tpu.memory_space<semaphore_mem>>
    %29 = tpu.memref_squeeze %28 : memref<1x1x!tpu.dma_semaphore, #tpu.memory_space<semaphore_mem>> -> memref<!tpu.dma_semaphore, #tpu.memory_space<semaphore_mem>>
    tpu.wait_dma2 semaphore(%29 : memref<!tpu.dma_semaphore, #tpu.memory_space<semaphore_mem>>) src(%25 : memref<4x256xf32, #tpu.memory_space<any>>) dst(%27 : memref<4x256xf32, #tpu.memory_space<any>>)
    %c0_i32_37 = arith.constant 0 : i32
    %c0_i32_38 = arith.constant 0 : i32
    %c0_i32_39 = arith.constant 0 : i32
    %c1_i32_40 = arith.constant 1 : i32
    %c0_i32_41 = arith.constant 0 : i32
    %c0_i32_42 = arith.constant 0 : i32
    %30 = tpu.memref_slice %arg1[%c0_i32_37, %c0_i32_41, %c0_i32_42] : memref<2x4x256xf32, #tpu.memory_space<any>> -> memref<1x4x256xf32, #tpu.memory_space<any>>
    %31 = tpu.memref_squeeze %30 : memref<1x4x256xf32, #tpu.memory_space<any>> -> memref<4x256xf32, #tpu.memory_space<any>>
    %c4_i32_43 = arith.constant 4 : i32
    %c0_i32_44 = arith.constant 0 : i32
    %32 = tpu.memref_slice %arg2[%c0_i32_38, %c4_i32_43, %c0_i32_44] : memref<2x8x256xf32, #tpu.memory_space<any>> -> memref<1x4x256xf32, #tpu.memory_space<any>>
    %33 = tpu.memref_squeeze %32 : memref<1x4x256xf32, #tpu.memory_space<any>> -> memref<4x256xf32, #tpu.memory_space<any>>
    %34 = tpu.memref_slice %arg3[%c0_i32_39, %c1_i32_40] : memref<2x2x!tpu.dma_semaphore, #tpu.memory_space<semaphore_mem>> -> memref<1x1x!tpu.dma_semaphore, #tpu.memory_space<semaphore_mem>>
    %35 = tpu.memref_squeeze %34 : memref<1x1x!tpu.dma_semaphore, #tpu.memory_space<semaphore_mem>> -> memref<!tpu.dma_semaphore, #tpu.memory_space<semaphore_mem>>
    tpu.wait_dma2 semaphore(%35 : memref<!tpu.dma_semaphore, #tpu.memory_space<semaphore_mem>>) src(%31 : memref<4x256xf32, #tpu.memory_space<any>>) dst(%33 : memref<4x256xf32, #tpu.memory_space<any>>)
    %c1_i32_45 = arith.constant 1 : i32
    %c1_i32_46 = arith.constant 1 : i32
    %c1_i32_47 = arith.constant 1 : i32
    %c0_i32_48 = arith.constant 0 : i32
    %c0_i32_49 = arith.constant 0 : i32
    %c0_i32_50 = arith.constant 0 : i32
    %36 = tpu.memref_slice %arg0[%c1_i32_45, %c0_i32_49, %c0_i32_50] : memref<2x4x256xf32, #tpu.memory_space<any>> -> memref<1x4x256xf32, #tpu.memory_space<any>>
    %37 = tpu.memref_squeeze %36 : memref<1x4x256xf32, #tpu.memory_space<any>> -> memref<4x256xf32, #tpu.memory_space<any>>
    %c0_i32_51 = arith.constant 0 : i32
    %c0_i32_52 = arith.constant 0 : i32
    %38 = tpu.memref_slice %arg2[%c1_i32_46, %c0_i32_51, %c0_i32_52] : memref<2x8x256xf32, #tpu.memory_space<any>> -> memref<1x4x256xf32, #tpu.memory_space<any>>
    %39 = tpu.memref_squeeze %38 : memref<1x4x256xf32, #tpu.memory_space<any>> -> memref<4x256xf32, #tpu.memory_space<any>>
    %40 = tpu.memref_slice %arg3[%c1_i32_47, %c0_i32_48] : memref<2x2x!tpu.dma_semaphore, #tpu.memory_space<semaphore_mem>> -> memref<1x1x!tpu.dma_semaphore, #tpu.memory_space<semaphore_mem>>
    %41 = tpu.memref_squeeze %40 : memref<1x1x!tpu.dma_semaphore, #tpu.memory_space<semaphore_mem>> -> memref<!tpu.dma_semaphore, #tpu.memory_space<semaphore_mem>>
    tpu.wait_dma2 semaphore(%41 : memref<!tpu.dma_semaphore, #tpu.memory_space<semaphore_mem>>) src(%37 : memref<4x256xf32, #tpu.memory_space<any>>) dst(%39 : memref<4x256xf32, #tpu.memory_space<any>>)
    %c1_i32_53 = arith.constant 1 : i32
    %c1_i32_54 = arith.constant 1 : i32
    %c1_i32_55 = arith.constant 1 : i32
    %c1_i32_56 = arith.constant 1 : i32
    %c0_i32_57 = arith.constant 0 : i32
    %c0_i32_58 = arith.constant 0 : i32
    %42 = tpu.memref_slice %arg1[%c1_i32_53, %c0_i32_57, %c0_i32_58] : memref<2x4x256xf32, #tpu.memory_space<any>> -> memref<1x4x256xf32, #tpu.memory_space<any>>
    %43 = tpu.memref_squeeze %42 : memref<1x4x256xf32, #tpu.memory_space<any>> -> memref<4x256xf32, #tpu.memory_space<any>>
    %c4_i32_59 = arith.constant 4 : i32
    %c0_i32_60 = arith.constant 0 : i32
    %44 = tpu.memref_slice %arg2[%c1_i32_54, %c4_i32_59, %c0_i32_60] : memref<2x8x256xf32, #tpu.memory_space<any>> -> memref<1x4x256xf32, #tpu.memory_space<any>>
    %45 = tpu.memref_squeeze %44 : memref<1x4x256xf32, #tpu.memory_space<any>> -> memref<4x256xf32, #tpu.memory_space<any>>
    %46 = tpu.memref_slice %arg3[%c1_i32_55, %c1_i32_56] : memref<2x2x!tpu.dma_semaphore, #tpu.memory_space<semaphore_mem>> -> memref<1x1x!tpu.dma_semaphore, #tpu.memory_space<semaphore_mem>>
    %47 = tpu.memref_squeeze %46 : memref<1x1x!tpu.dma_semaphore, #tpu.memory_space<semaphore_mem>> -> memref<!tpu.dma_semaphore, #tpu.memory_space<semaphore_mem>>
    tpu.wait_dma2 semaphore(%47 : memref<!tpu.dma_semaphore, #tpu.memory_space<semaphore_mem>>) src(%43 : memref<4x256xf32, #tpu.memory_space<any>>) dst(%45 : memref<4x256xf32, #tpu.memory_space<any>>)
    return
  }
}

module attributes {stable_mosaic.version = 11 : i64} {
  func.func @_concat_kernel_fused(%arg0: i32, %arg1: i32, %arg2: memref<1x4x256xf32, #tpu.memory_space<vmem>>, %arg3: memref<1x4x256xf32, #tpu.memory_space<vmem>>, %arg4: memref<1x8x256xf32, #tpu.memory_space<vmem>>) attributes {dimension_semantics = [#tpu.dimension_semantics<parallel>, #tpu.dimension_semantics<parallel>], iteration_bounds = array<i64: 2, 1>, scalar_prefetch = 0 : i64, scratch_operands = 0 : i64, tpu.core_type = #tpu.core_type<tc>, window_params = [{transform_indices = @transform_0, window_bounds = array<i64: 1, 4, 256>}, {transform_indices = @transform_1, window_bounds = array<i64: 1, 4, 256>}, {transform_indices = @transform_2, window_bounds = array<i64: 1, 8, 256>}]} {
    %c0 = arith.constant 0 : index
    %c0_0 = arith.constant 0 : index
    %c0_1 = arith.constant 0 : index
    %0 = vector.load %arg2[%c0, %c0_0, %c0_1] : memref<1x4x256xf32, #tpu.memory_space<vmem>>, vector<1x4x256xf32>
    %c0_2 = arith.constant 0 : index
    %c0_3 = arith.constant 0 : index
    %c0_4 = arith.constant 0 : index
    %1 = vector.load %arg3[%c0_2, %c0_3, %c0_4] : memref<1x4x256xf32, #tpu.memory_space<vmem>>, vector<1x4x256xf32>
    %2 = tpu.concatenate %0, %1 in 1 : vector<1x4x256xf32>, vector<1x4x256xf32> -> vector<1x8x256xf32>
    %c0_5 = arith.constant 0 : index
    %c0_6 = arith.constant 0 : index
    %c0_7 = arith.constant 0 : index
    %3 = vector.load %arg4[%c0_5, %c0_6, %c0_7] : memref<1x8x256xf32, #tpu.memory_space<vmem>>, vector<1x8x256xf32>
    tpu.vector_store %arg4[%c0_5, %c0_6, %c0_7], %2 {strides = array<i32>} : memref<1x8x256xf32, #tpu.memory_space<vmem>>, vector<1x8x256xf32>,
    return
  }
  func.func @transform_0(%arg0: i32, %arg1: i32) -> (i32, i32, i32) {
    %c0_i32 = arith.constant 0 : i32
    %c0_i32_0 = arith.constant 0 : i32
    return %arg0, %c0_i32, %arg1 : i32, i32, i32
  }
  func.func @transform_1(%arg0: i32, %arg1: i32) -> (i32, i32, i32) {
    %c0_i32 = arith.constant 0 : i32
    %c0_i32_0 = arith.constant 0 : i32
    return %arg0, %c0_i32, %arg1 : i32, i32, i32
  }
  func.func @transform_2(%arg0: i32, %arg1: i32) -> (i32, i32, i32) {
    %c0_i32 = arith.constant 0 : i32
    %c0_i32_0 = arith.constant 0 : i32
    return %arg0, %c0_i32, %arg1 : i32, i32, i32
  }
}

</mosaic_0001>

<llo_original>
// kernel: tpu_custom_call.1
$region0: #{tpu_custom_call.1}
  #allocation0 [shape = 'u32[]', space=smem, size = 0x4, offset = 0x4, fixed_abs, tag = 'smem constant byte address 0x4 - core index']
  #allocation1 [shape = 'u32[72,128]{1,0:T(1,128)}', space=vmem, size = 0x9000, scoped, tag = 'internal scratch']
  %s0 = inlined_call_operand.hbm [shape: f32[2,4,256], index: 0, kind: input, shape index: {}]
  %s1 = inlined_call_operand.hbm [shape: f32[2,4,256], index: 1, kind: input, shape index: {}]
  %s2 = inlined_call_operand.hbm [shape: f32[2,8,256], index: 2, kind: output, shape index: {}]
  %s3 = sld [smem:[#allocation0]]
  $region49: #{tpu_custom_call.1} parent=0
    _
  %s5 = ssub.s32 1, %s3
  %s6 = scalar_select 0, %s5, %s3
  $region1: #{tpu_custom_call.1} parent=0
    #allocation2 [shape = 'u8[8192]{0}', space=vmem, size = 0x2000, scoped, tag = 'input window, operand 0']
    #allocation3 [shape = 's32[2]{0}', space=sflag, size = 0x8, scoped, tag = 'scoped memory for tpu_custom_call.1']
    #allocation4 [shape = 's32[2]{0}', space=sflag, size = 0x8, scoped, tag = 'scoped memory for tpu_custom_call.1']
    #allocation5 [shape = 'u8[8192]{0}', space=vmem, size = 0x2000, scoped, tag = 'input window, operand 1']
    #allocation6 [shape = 's32[2]{0}', space=sflag, size = 0x8, scoped, tag = 'scoped memory for tpu_custom_call.1']
    #allocation7 [shape = 'u8[16384]{0}', space=vmem, size = 0x4000, scoped, tag = 'output window, operand 0']
    %7 = vsyncpa [#allocation3], 0
    %s8 = scalar_lea.sflag [#allocation3], 1
    %9 = vsyncpa %s8, 0
    %10 = vsyncpa [#allocation6], 0
    %s11 = scalar_lea.sflag [#allocation6], 1
    %12 = vsyncpa %s11, 0
    %13 = vsyncpa [#allocation4], 0
    %s14 = scalar_lea.sflag [#allocation4], 1
    %15 = vsyncpa %s14, 0
    loop: start=0, step=1, limit=4
    $region2: #{tpu_custom_call.1} parent=1 // loop_pre_header
      _
    $region3: #{tpu_custom_call.1} parent=1 // loop_header
      %s17 = sphi 0, %s21
      %p18 = scmp.ge.s32.totalorder %s17, 4
      %s24 = sphi 0, %s36
      %s25 = sphi 0, %s32
      %s26 = sphi 0, %s24
      %s27 = sphi 0, %s25
      %s28 = sphi 0, %s26
      %s29 = sphi 0, %s27
      %s41 = sphi 0, %s43
      %s44 = sphi 0, %s41
      %s45 = sphi 0, %s44
      %s61 = sphi 0, %s45
      %s69 = sphi 0, %s71
      %s72 = sphi 0, %s69
      %s73 = sphi 0, %s72
      %s89 = sphi 0, %s73
      %s97 = sphi 0, %s99
      %s100 = sphi 0, %s97
      %s101 = sphi 0, %s100
      %s117 = sphi 0, %s101
    $region4: #{tpu_custom_call.1} parent=1 // loop_header_branch
      %20 = sbr.rel (%p18) target = $region8
    $region5: #{tpu_custom_call.1} parent=1 // loop_body
      %s22 = ssub.s32 %s17, 1
      %s23 = ssub.s32 %s17, 2
      %s30 = sadd.s32 1, %s25
      %p31 = scmp.ge.s32.totalorder %s30, 1
      %s32 = scalar_select %p31, 0, %s30
      %s33 = sadd.s32 1, %s24
      %s34 = scalar_select %p31, %s33, %s24
      %p35 = scmp.ge.s32.totalorder %s34, 2
      %s36 = scalar_select %p35, 0, %s34
      %s37 = ssub.s32 %s24, %s36
      %s38 = ssub.s32 %s25, %s32
      %s39 = sor.u32 %s37, %s38
      %p40 = scmp.eq.s32.totalorder %s39, 0
      %s42 = sadd.s32 %s41, 1
      %s43 = scalar_select %p40, %s41, %s42
      %p46 = pneg %p40
      %p47 = scmp.eq.s32.totalorder %s17, 1
      %p48 = por %p46, %p47
      %p49 = scmp.ne.s32.totalorder %s41, %s44
      %p50 = scmp.eq.s32.totalorder %s17, 0
      %p51 = por %p49, %p50
      %p52 = scmp.ne.s32.totalorder %s41, %s44
      %p53 = scmp.eq.s32.totalorder %s22, 1
      %p54 = por %p52, %p53
      %p55 = scmp.ne.s32.totalorder %s44, %s45
      %p56 = scmp.eq.s32.totalorder %s22, 0
      %p57 = por %p55, %p56
      %p58 = scmp.ne.s32.totalorder %s44, %s45
      %p59 = scmp.eq.s32.totalorder %s23, 1
      %p60 = por %p58, %p59
      %p62 = scmp.ne.s32.totalorder %s45, %s61
      %p63 = scmp.eq.s32.totalorder %s23, 0
      %p64 = por %p62, %p63
      %s65 = ssub.s32 %s24, %s36
      %s66 = ssub.s32 %s25, %s32
      %s67 = sor.u32 %s65, %s66
      %p68 = scmp.eq.s32.totalorder %s67, 0
      %s70 = sadd.s32 %s69, 1
      %s71 = scalar_select %p68, %s69, %s70
      %p74 = pneg %p68
      %p75 = scmp.eq.s32.totalorder %s17, 1
      %p76 = por %p74, %p75
      %p77 = scmp.ne.s32.totalorder %s69, %s72
      %p78 = scmp.eq.s32.totalorder %s17, 0
      %p79 = por %p77, %p78
      %p80 = scmp.ne.s32.totalorder %s69, %s72
      %p81 = scmp.eq.s32.totalorder %s22, 1
      %p82 = por %p80, %p81
      %p83 = scmp.ne.s32.totalorder %s72, %s73
      %p84 = scmp.eq.s32.totalorder %s22, 0
      %p85 = por %p83, %p84
      %p86 = scmp.ne.s32.totalorder %s72, %s73
      %p87 = scmp.eq.s32.totalorder %s23, 1
      %p88 = por %p86, %p87
      %p90 = scmp.ne.s32.totalorder %s73, %s89
      %p91 = scmp.eq.s32.totalorder %s23, 0
      %p92 = por %p90, %p91
      %s93 = ssub.s32 %s24, %s36
      %s94 = ssub.s32 %s25, %s32
      %s95 = sor.u32 %s93, %s94
      %p96 = scmp.eq.s32.totalorder %s95, 0
      %s98 = sadd.s32 %s97, 1
      %s99 = scalar_select %p96, %s97, %s98
      %p102 = pneg %p96
      %p103 = scmp.eq.s32.totalorder %s17, 1
      %p104 = por %p102, %p103
      %p105 = scmp.ne.s32.totalorder %s97, %s100
      %p106 = scmp.eq.s32.totalorder %s17, 0
      %p107 = por %p105, %p106
      %p108 = scmp.ne.s32.totalorder %s97, %s100
      %p109 = scmp.eq.s32.totalorder %s22, 1
      %p110 = por %p108, %p109
      %p111 = scmp.ne.s32.totalorder %s100, %s101
      %p112 = scmp.eq.s32.totalorder %s22, 0
      %p113 = por %p111, %p112
      %p114 = scmp.ne.s32.totalorder %s100, %s101
      %p115 = scmp.eq.s32.totalorder %s23, 1
      %p116 = por %p114, %p115
      %p118 = scmp.ne.s32.totalorder %s101, %s117
      %p119 = scmp.eq.s32.totalorder %s23, 0
      %p120 = por %p118, %p119
      %p121 = scmp.le.s32.totalorder 1, %s17
      %p122 = scmp.lt.s32.totalorder %s17, 3
      %p123 = pnand %p121, %p122
      %p124 = pneg %p123
      // Predicated region
      $region9: #{tpu_custom_call.1} parent=5 // pred_check
        _
      $region10: #{tpu_custom_call.1} parent=5 // pred_check_branch
        %126 = sbr.rel (%p123) target = $region12
      $region11: #{tpu_custom_call.1} parent=5 // pred_region
        %s127 = ssub.s32 %s17, 1
      $region12: #{tpu_custom_call.1} parent=5 // pred_fallthru
        _
      %p128 = scmp.lt.s32.totalorder %s17, 2
      // Predicated region
      $region13: #{tpu_custom_call.1} parent=5 // pred_check
        %p129 = pneg %p128
      $region14: #{tpu_custom_call.1} parent=5 // pred_check_branch
        %131 = sbr.rel (%p129) target = $region16
      $region15: #{tpu_custom_call.1} parent=5 // pred_region
        // Predicated region
        $region17: #{tpu_custom_call.1} parent=15 // pred_check
          %p132 = pneg %p51
        $region18: #{tpu_custom_call.1} parent=15 // pred_check_branch
          %134 = sbr.rel (%p132) target = $region20
        $region19: #{tpu_custom_call.1} parent=15 // pred_region
          %s135 = sand.u32 %s41, 1
          %s136 = scalar_lea.sflag [#allocation3], %s135
          %s137 = sand.u32 %s41, 1
          %s138 = smul.addr %s137, 8
          %s139 = scalar_lea.vmem [#allocation2], %s138
          %s140 = smul.u32 2, %s25
          %142 = vsyncadd %s136, 0
          %s143 = smul.addr %s24, 2
          %s144 = sadd.s32 %s140, %s143
          %s145 = smul.addr %s144, 4
          %s146 = scalar_lea.hbm %s0, %s145
          %s148 = sshll.u32 %s146, 4
          %s149 = int_to_ptr.hbm [resolvable:$true] %s148
          %s150 = sshll.u32 %s139, 4
          %s151 = int_to_ptr.vmem [resolvable:$true] %s150
          %153 = dma.hbm_to_vmem [thread:$0]  %s149, 128, %s151, %s136
        $region20: #{tpu_custom_call.1} parent=15 // pred_fallthru
          _
        // Predicated region
        $region21: #{tpu_custom_call.1} parent=15 // pred_check
          %p154 = pneg %p79
        $region22: #{tpu_custom_call.1} parent=15 // pred_check_branch
          %156 = sbr.rel (%p154) target = $region24
        $region23: #{tpu_custom_call.1} parent=15 // pred_region
          %s157 = sand.u32 %s69, 1
          %s158 = scalar_lea.sflag [#allocation6], %s157
          %s159 = sand.u32 %s69, 1
          %s160 = smul.addr %s159, 8
          %s161 = scalar_lea.vmem [#allocation5], %s160
          %s162 = smul.u32 2, %s25
          %164 = vsyncadd %s158, 0
          %s165 = smul.addr %s24, 2
          %s166 = sadd.s32 %s162, %s165
          %s167 = smul.addr %s166, 4
          %s168 = scalar_lea.hbm %s1, %s167
          %s170 = sshll.u32 %s168, 4
          %s171 = int_to_ptr.hbm [resolvable:$true] %s170
          %s172 = sshll.u32 %s161, 4
          %s173 = int_to_ptr.vmem [resolvable:$true] %s172
          %175 = dma.hbm_to_vmem [thread:$0]  %s171, 128, %s173, %s158
        $region24: #{tpu_custom_call.1} parent=15 // pred_fallthru
          _
      $region16: #{tpu_custom_call.1} parent=5 // pred_fallthru
        _
      %p176 = scmp.le.s32.totalorder 1, %s17
      %p177 = scmp.lt.s32.totalorder %s17, 3
      %p178 = pnand %p176, %p177
      %p179 = pneg %p178
      // Predicated region
      $region25: #{tpu_custom_call.1} parent=5 // pred_check
        _
      $region26: #{tpu_custom_call.1} parent=5 // pred_check_branch
        %181 = sbr.rel (%p178) target = $region28
      $region27: #{tpu_custom_call.1} parent=5 // pred_region
        %s182 = ssub.s32 %s17, 1
        %s183 = sand.u32 %s44, 1
        %s184 = scalar_lea.sflag [#allocation3], %s183
        %s185 = sand.u32 %s44, 1
        %s186 = smul.addr %s185, 8
        %s187 = scalar_lea.vmem [#allocation2], %s186
        // Predicated region
        $region29: #{tpu_custom_call.1} parent=27 // pred_check
          %p188 = pneg %p57
        $region30: #{tpu_custom_call.1} parent=27 // pred_check_branch
          %190 = sbr.rel (%p188) target = $region32
        $region31: #{tpu_custom_call.1} parent=27 // pred_region
          %192 = dma.done %s184, 128
        $region32: #{tpu_custom_call.1} parent=27 // pred_fallthru
          _
        %s193 = sand.u32 %s72, 1
        %s194 = scalar_lea.sflag [#allocation6], %s193
        %s195 = sand.u32 %s72, 1
        %s196 = smul.addr %s195, 8
        %s197 = scalar_lea.vmem [#allocation5], %s196
        // Predicated region
        $region33: #{tpu_custom_call.1} parent=27 // pred_check
          %p198 = pneg %p85
        $region34: #{tpu_custom_call.1} parent=27 // pred_check_branch
          %200 = sbr.rel (%p198) target = $region36
        $region35: #{tpu_custom_call.1} parent=27 // pred_region
          %202 = dma.done %s194, 128
        $region36: #{tpu_custom_call.1} parent=27 // pred_fallthru
          _
        %s203 = sand.u32 %s44, 1
        %s204 = scalar_lea.sflag [#allocation3], %s203
        %s205 = sand.u32 %s44, 1
        %s206 = smul.addr %s205, 8
        %s207 = scalar_lea.vmem [#allocation2], %s206
        %p208 = pneg %p57
        %p209 = pneg %p54
        %s210 = sand.u32 %s72, 1
        %s211 = scalar_lea.sflag [#allocation6], %s210
        %s212 = sand.u32 %s72, 1
        %s213 = smul.addr %s212, 8
        %s214 = scalar_lea.vmem [#allocation5], %s213
        %p215 = pneg %p85
        %p216 = pneg %p82
        %p217 = pneg %p113
        %p218 = pneg %p110
        %s219 = sand.u32 %s100, 1
        %s220 = scalar_lea.sflag [#allocation4], %s219
        %s221 = sand.u32 %s100, 1
        %s222 = smul.addr %s221, 16
        %s223 = scalar_lea.vmem [#allocation7], %s222
        %s224 = smul.u32 2, %s27
        %s225 = smul.u32 2, %s27
        %s226 = smul.u32 2, %s27
        %v227 = vld [vmem:[%s187] sm:$0xff]
        %v228 = vld [vmem:[%s197] sm:$0xff]
        %230 = vst [vmem:[#allocation1] ss:$2 sm:$0xff] %v227
        %v231 = vld.sshfl [vmem:[#allocation1] sm:$0xff pattern:$0x75316420]
        %v232 = vld.sshfl [vmem:[#allocation1 + $0x8] sm:$0xff pattern:$0x75316420]
        %s236 = scalar_lea.vmem [#allocation1], 1
        %237 = vst [vmem:[%s236] ss:$2 sm:$0xff] %v228
        %v238 = vld.sshfl [vmem:[#allocation1] sm:$0xff pattern:$0x75316420]
        %v239 = vld.sshfl [vmem:[#allocation1 + $0x8] sm:$0xff pattern:$0x75316420]
        %vm242 = vcmask 1043456
        %v243 = vsel %vm242, %v231, %v238
        %v244 = vsel %vm242, %v232, %v239
        %245 = vst [vmem:[%s223] sm:$0xff] %v243
        %246 = vst [vmem:[%s223 + $0x8] sm:$0xff] %v244
        %s247 = sand.u32 %s100, 1
        %s248 = scalar_lea.sflag [#allocation4], %s247
        %s249 = sand.u32 %s100, 1
        %s250 = smul.addr %s249, 16
        %s251 = scalar_lea.vmem [#allocation7], %s250
        // Predicated region
        $region37: #{tpu_custom_call.1} parent=27 // pred_check
          %p252 = pneg %p110
        $region38: #{tpu_custom_call.1} parent=27 // pred_check_branch
          %254 = sbr.rel (%p252) target = $region40
        $region39: #{tpu_custom_call.1} parent=27 // pred_region
          %s255 = smul.u32 2, %s27
          %257 = vsyncadd %s248, 0
          %s258 = smul.addr %s26, 2
          %s259 = sadd.s32 %s255, %s258
          %s260 = smul.addr %s259, 8
          %s261 = scalar_lea.hbm %s2, %s260
          %s263 = sshll.u32 %s251, 4
          %s264 = int_to_ptr.vmem [resolvable:$true] %s263
          %s265 = sshll.u32 %s261, 4
          %s266 = int_to_ptr.hbm [resolvable:$true] %s265
          %268 = dma.vmem_to_hbm [thread:$0]  %s264, 256, %s266, %s248
        $region40: #{tpu_custom_call.1} parent=27 // pred_fallthru
          _
      $region28: #{tpu_custom_call.1} parent=5 // pred_fallthru
        _
      %p269 = scmp.le.s32.totalorder 2, %s17
      // Predicated region
      $region41: #{tpu_custom_call.1} parent=5 // pred_check
        %p270 = pneg %p269
      $region42: #{tpu_custom_call.1} parent=5 // pred_check_branch
        %272 = sbr.rel (%p270) target = $region44
      $region43: #{tpu_custom_call.1} parent=5 // pred_region
        %s273 = ssub.s32 %s17, 2
        // Predicated region
        $region45: #{tpu_custom_call.1} parent=43 // pred_check
          %p274 = pneg %p116
        $region46: #{tpu_custom_call.1} parent=43 // pred_check_branch
          %276 = sbr.rel (%p274) target = $region48
        $region47: #{tpu_custom_call.1} parent=43 // pred_region
          %s277 = sand.u32 %s101, 1
          %s278 = scalar_lea.sflag [#allocation4], %s277
          %s279 = sand.u32 %s101, 1
          %s280 = smul.addr %s279, 16
          %s281 = scalar_lea.vmem [#allocation7], %s280
          %283 = dma.done %s278, 256
        $region48: #{tpu_custom_call.1} parent=43 // pred_fallthru
          _
      $region44: #{tpu_custom_call.1} parent=5 // pred_fallthru
        _
    $region6: #{tpu_custom_call.1} parent=1 // loop_footer
      %s21 = sadd.s32 1, %s17
    $region7: #{tpu_custom_call.1} parent=1 // loop_footer_branch
      %16 = sbr.rel target = $region3
    $region8: #{tpu_custom_call.1} parent=1 // loop_exit
      _
    %284 = vsyncpa [#allocation3], 1
    %s285 = scalar_lea.sflag [#allocation3], 1
    %286 = vsyncpa %s285, 1
    %287 = vsyncpa [#allocation6], 1
    %s288 = scalar_lea.sflag [#allocation6], 1
    %289 = vsyncpa %s288, 1
    %290 = vsyncpa [#allocation4], 1
    %s291 = scalar_lea.sflag [#allocation4], 1
    %292 = vsyncpa %s291, 1

</llo_original>
